<compile_context>
chip_gen: v5e
topology: v5e:2x2
jax: 0.10.0
libtpu: 0.0.40
codegen_flags: <defaults>
</compile_context>

<pallas_src>
import functools

import jax
import jax.numpy as jnp
from jax import lax
from jax.experimental import pallas as pl
from jax.experimental.pallas import tpu as pltpu

_LANES = 128
_SUBLANES = 8
_MAX_TILE_ROWS = 4096   # 4096 x 128 f32 = 2 MiB per input per buffer
_MAX_BATCH_BLOCK = 512  # cap images per block in the small-image path


def _threshold_bool(x, threshold):
    # torch.where(torch.lt(x, thr), 0, 1).bool()  ==  (x >= thr)
    if jnp.issubdtype(x.dtype, jnp.floating):
        # Native-dtype compare (memory-bound kernel; values within dtype
        # epsilon of the threshold may differ from a forced-f32 compare).
        return x >= jnp.asarray(threshold, x.dtype)
    return x.astype(jnp.float32) >= jnp.float32(threshold)


# ----------------------------------------------------------------------------
# Streaming path: grid = (B, n_tiles), one image per block row, tiles over N.
# ----------------------------------------------------------------------------
def _stream_counts_kernel(pred_ref, tgt_ref, out_ref, acc_ref, *,
                          threshold, n_valid, block_elems, needs_mask):
    # pred_ref/tgt_ref: (1, tile_r, 128) native dtype
    # out_ref         : (1, 3, 8, 128) f32, resident across the tile axis
    # acc_ref         : (3, 8, 128) f32 scratch (tp, pred_pos, tgt_pos partials)
    k = pl.program_id(1)
    last = pl.num_programs(1) - 1

    @pl.when(k == 0)
    def _():
        acc_ref[...] = jnp.zeros_like(acc_ref)

    def _accumulate(apply_mask):
        pf = _threshold_bool(pred_ref[0], threshold).astype(jnp.float32)
        tf = _threshold_bool(tgt_ref[0], threshold).astype(jnp.float32)
        if apply_mask:
            rows = lax.broadcasted_iota(jnp.int32, pf.shape, 0)
            lanes = lax.broadcasted_iota(jnp.int32, pf.shape, 1)
            idx = k * block_elems + rows * _LANES + lanes
            m = (idx < n_valid).astype(jnp.float32)
            pf = pf * m
            tf = tf * m
        # Purely elementwise VPU adds; only one vreg per count is stored.
        acc_ref[0] += jnp.sum((pf * tf).reshape(-1, _SUBLANES, _LANES), axis=0)
        acc_ref[1] += jnp.sum(pf.reshape(-1, _SUBLANES, _LANES), axis=0)
        acc_ref[2] += jnp.sum(tf.reshape(-1, _SUBLANES, _LANES), axis=0)

    if needs_mask:
        @pl.when(k != last)
        def _():
            _accumulate(False)

        @pl.when(k == last)
        def _():
            _accumulate(True)
    else:
        _accumulate(False)

    @pl.when(k == last)
    def _():
        out_ref[0] = acc_ref[...]


def _run_streaming(pred3, tgt3, threshold, n_valid, max_tile_rows):
    B, r, _ = pred3.shape
    r8 = ((r + _SUBLANES - 1) // _SUBLANES) * _SUBLANES
    tile_r = max(_SUBLANES, min((max_tile_rows // _SUBLANES) * _SUBLANES, r8))
    n_tiles = (r + tile_r - 1) // tile_r
    block_elems = tile_r * _LANES
    needs_mask = (n_tiles * block_elems != n_valid)

    kernel = functools.partial(
        _stream_counts_kernel, threshold=float(threshold),
        n_valid=int(n_valid), block_elems=int(block_elems),
        needs_mask=needs_mask)

    cost = pl.CostEstimate(
        flops=8 * B * r * _LANES,
        transcendentals=0,
        bytes_accessed=(pred3.size * pred3.dtype.itemsize
                        + tgt3.size * tgt3.dtype.itemsize
                        + B * 3 * _SUBLANES * _LANES * 4))

    counts = pl.pallas_call(
        kernel,
        out_shape=jax.ShapeDtypeStruct((B, 3, _SUBLANES, _LANES), jnp.float32),
        grid_spec=pltpu.PrefetchScalarGridSpec(
            num_scalar_prefetch=0,
            grid=(B, n_tiles),
            in_specs=[
                pl.BlockSpec((1, tile_r, _LANES), lambda b, k: (b, k, 0)),
                pl.BlockSpec((1, tile_r, _LANES), lambda b, k: (b, k, 0)),
            ],
            out_specs=pl.BlockSpec((1, 3, _SUBLANES, _LANES),
                                   lambda b, k: (b, 0, 0, 0)),
            scratch_shapes=[pltpu.VMEM((3, _SUBLANES, _LANES), jnp.float32)],
        ),
        compiler_params=pltpu.CompilerParams(
            dimension_semantics=("parallel", "arbitrary")),
        cost_estimate=cost,
    )(pred3, tgt3)

    # Per-cell partials are exact small integers; do the final sum in int32 so
    # the totals stay exact up to 2^31 pixels per image.
    return jnp.sum(counts.astype(jnp.int32), axis=(2, 3))   # (B, 3)


# ----------------------------------------------------------------------------
# Small-image path: pack several images per block, grid = (B // TB,).
# ----------------------------------------------------------------------------
def _batched_counts_kernel(pred_ref, tgt_ref, out_ref, *,
                           threshold, n_valid, needs_mask):
    # pred_ref/tgt_ref: (TB, r, 128) native dtype; out_ref: (TB, 8, 128) f32
    pf = _threshold_bool(pred_ref[...], threshold).astype(jnp.float32)
    tf = _threshold_bool(tgt_ref[...], threshold).astype(jnp.float32)
    if needs_mask:
        rows = lax.broadcasted_iota(jnp.int32, pf.shape, 1)
        lanes = lax.broadcasted_iota(jnp.int32, pf.shape, 2)
        m = ((rows * _LANES + lanes) < n_valid).astype(jnp.float32)
        pf = pf * m
        tf = tf * m
    s_tp = jnp.sum(pf * tf, axis=1)   # (TB, 128)
    s_p = jnp.sum(pf, axis=1)
    s_t = jnp.sum(tf, axis=1)
    row = lax.broadcasted_iota(jnp.int32, out_ref.shape, 1)
    out_ref[...] = jnp.where(
        row == 0, s_tp[:, None, :],
        jnp.where(row == 1, s_p[:, None, :],
                  jnp.where(row == 2, s_t[:, None, :], jnp.float32(0.0))))


def _run_batched(pred3, tgt3, threshold, n_valid, tb):
    B, r, _ = pred3.shape
    n_groups = (B + tb - 1) // tb
    needs_mask = (r * _LANES != n_valid)

    kernel = functools.partial(
        _batched_counts_kernel, threshold=float(threshold),
        n_valid=int(n_valid), needs_mask=needs_mask)

    counts = pl.pallas_call(
        kernel,
        out_shape=jax.ShapeDtypeStruct((n_groups * tb, _SUBLANES, _LANES),
                                       jnp.float32),
        grid_spec=pltpu.PrefetchScalarGridSpec(
            num_scalar_prefetch=0,
            grid=(n_groups,),
            in_specs=[
                pl.BlockSpec((tb, r, _LANES), lambda i: (i, 0, 0)),
                pl.BlockSpec((tb, r, _LANES), lambda i: (i, 0, 0)),
            ],
            out_specs=pl.BlockSpec((tb, _SUBLANES, _LANES), lambda i: (i, 0, 0)),
        ),
        compiler_params=pltpu.CompilerParams(
            dimension_semantics=("parallel",)),
    )(pred3, tgt3)

    # Rows >= B (ragged last batch block) hold garbage; slice them off first.
    return jnp.sum(counts[:B, :3, :].astype(jnp.int32), axis=-1)   # (B, 3)


# ----------------------------------------------------------------------------
# Wrapper
# ----------------------------------------------------------------------------
def binary_segm_precision_recall_f1_pallas(pred, target, threshold=0.5,
                                           max_tile_rows=_MAX_TILE_ROWS):
    """pred, target: [B, ...] (e.g. [B, 1, H, W]). Returns (precision, recall, f1), each [B]."""
    assert pred.shape == target.shape
    B = pred.shape[0]

    # Keep native dtypes: the kernel is HBM-bandwidth bound, never upcast here.
    pred2 = pred.reshape(B, -1)
    tgt2 = target.reshape(B, -1)
    N = pred2.shape[1]

    # Only pad N up to the next multiple of 128 (needed for the lane-dense
    # reshape).  Common case N % 128 == 0 -> pure reshape, no HBM copy.
    n128 = ((N + _LANES - 1) // _LANES) * _LANES
    if n128 != N:
        pred2 = jnp.pad(pred2, ((0, 0), (0, n128 - N)))
        tgt2 = jnp.pad(tgt2, ((0, 0), (0, n128 - N)))
    r = n128 // _LANES
    pred3 = pred2.reshape(B, r, _LANES)
    tgt3 = tgt2.reshape(B, r, _LANES)

    # Pick path: pack multiple images per block when images are small.
    tb = min(B, max_tile_rows // max(r, 1), _MAX_BATCH_BLOCK)
    if tb >= 2:
        counts = _run_batched(pred3, tgt3, threshold, N, tb)
    else:
        counts = _run_streaming(pred3, tgt3, threshold, N, max_tile_rows)

    tp = counts[:, 0].astype(jnp.float32)
    pred_pos = counts[:, 1].astype(jnp.float32)   # tp + fp
    tgt_pos = counts[:, 2].astype(jnp.float32)    # tp + fn

    # Same arithmetic (incl. 0/0 -> NaN semantics) as the PyTorch module.
    precision = tp / pred_pos
    recall = tp / tgt_pos
    f1 = 2.0 * precision * recall / (precision + recall)
    return precision, recall, f1


class BinarySegmPrecisionRecallF1:
    """JAX/Pallas port of the PyTorch module (forward only)."""

    def __init__(self, threshold: float = 0.5, reduction: str = "mean"):
        if reduction not in ["none", "mean", "sum"]:
            raise ValueError(
                f"reduction should be 'none', 'mean' or 'sum', get '{reduction}'"
            )
        self.threshold = threshold
        self.reduction = reduction

    def __call__(self, pred, target):
        # TODO(synk): the PyTorch runtime value-assert (0 <= pred <= 1).all()
        # needs a device->host sync / checkify and is not reproduced here.
        assert pred.shape == target.shape
        assert pred.shape[1] == 1
        precision, recall, f1 = binary_segm_precision_recall_f1_pallas(
            pred, target, threshold=self.threshold
        )
        if self.reduction == "mean":
            return dict(precision=precision.mean(), recall=recall.mean(), f1=f1.mean())
        elif self.reduction == "sum":
            return dict(precision=precision.sum(), recall=recall.sum(), f1=f1.sum())
        else:  # 'none'
            return dict(precision=precision, recall=recall, f1=f1)


def _reference(pred, target, threshold=0.5):
    B = pred.shape[0]
    p = pred.reshape(B, -1) >= threshold
    t = target.reshape(B, -1) >= threshold
    tp = jnp.sum(p & t, axis=-1).astype(jnp.float32)
    fp = jnp.sum(p & ~t, axis=-1).astype(jnp.float32)
    fn = jnp.sum(~p & t, axis=-1).astype(jnp.float32)
    precision = tp / (tp + fp)
    recall = tp / (tp + fn)
    f1 = 2 * precision * recall / (precision + recall)
    return precision, recall, f1


if __name__ == "__main__":
    key = jax.random.PRNGKey(0)
    keys = jax.random.split(key, 10)

    # Primary: module-shaped input (B, 1, H, W) -> exercises the batched path.
    B, C, H, W = 2, 1, 16, 16
    pred = jax.random.uniform(keys[0], (B, C, H, W), dtype=jnp.float32)          # in [0, 1]
    target = (jax.random.uniform(keys[1], (B, C, H, W)) > 0.5).astype(jnp.float32)

    metric = BinarySegmPrecisionRecallF1(threshold=0.5, reduction="mean")
    out = metric(pred, target)
    out = jax.tree_util.tree_map(jax.block_until_ready, out)

    p_ref, r_ref, f_ref = _reference(pred, target, 0.5)
    ref = dict(precision=p_ref.mean(), recall=r_ref.mean(), f1=f_ref.mean())
    for name in ("precision", "recall", "f1"):
        assert jnp.allclose(out[name], ref[name], atol=1e-6, equal_nan=True), (
            name, out[name], ref[name])

    out_none = BinarySegmPrecisionRecallF1(0.5, "none")(pred, target)
    out_none = jax.tree_util.tree_map(jax.block_until_ready, out_none)
    assert jnp.allclose(out_none["precision"], p_ref, atol=1e-6, equal_nan=True)
    assert jnp.allclose(out_none["recall"], r_ref, atol=1e-6, equal_nan=True)
    assert jnp.allclose(out_none["f1"], f_ref, atol=1e-6, equal_nan=True)

    # Path coverage at small shapes.
    def _check(pred_t, target_t, thr=0.5, **kw):
        p, r, f = binary_segm_precision_recall_f1_pallas(pred_t, target_t, thr, **kw)
        jax.block_until_ready(f)
        pr, rr, fr = _reference(pred_t, target_t, thr)
        for a, b in ((p, pr), (r, rr), (f, fr)):
            assert jnp.allclose(a, b, atol=1e-6, equal_nan=True), (a, b)

    # Streaming path with lane padding + ragged, masked last tile
    # (N = 1600 -> pad to 1664, r = 13 rows, tile_r = 8, 2 tiles).
    pa = jax.random.uniform(keys[2], (2, 1, 40, 40), dtype=jnp.float32)
    ta = (jax.random.uniform(keys[3], (2, 1, 40, 40)) > 0.5).astype(jnp.float32)
    _check(pa, ta, max_tile_rows=8)

    # Streaming path, exact tiling, no mask (N = 2048, r = 16, 2 tiles of 8).
    pc = jax.random.uniform(keys[4], (2, 1, 16, 128), dtype=jnp.float32)
    tc = (jax.random.uniform(keys[5], (2, 1, 16, 128)) > 0.5).astype(jnp.float32)
    _check(pc, tc, max_tile_rows=8)

    # Batched path with a ragged last batch block (B=5, TB=2 -> 3 groups).
    pd = jax.random.uniform(keys[6], (5, 1, 16, 16), dtype=jnp.float32)
    td = (jax.random.uniform(keys[7], (5, 1, 16, 16)) > 0.5).astype(jnp.float32)
    _check(pd, td, max_tile_rows=4)

    print("KERNEL_OK")
</pallas_src>

<mosaic_0001>
module attributes {stable_mosaic.version = 11 : i64} {
  func.func @_batched_counts_kernel(%arg0: i32, %arg1: memref<2x2x128xf32, #tpu.memory_space<vmem>>, %arg2: memref<2x2x128xf32, #tpu.memory_space<vmem>>, %arg3: memref<2x8x128xf32, #tpu.memory_space<vmem>>) attributes {dimension_semantics = [#tpu.dimension_semantics<parallel>], iteration_bounds = array<i64: 1>, scalar_prefetch = 0 : i64, scratch_operands = 0 : i64, tpu.core_type = #tpu.core_type<tc>, window_params = [{transform_indices = @transform_0, window_bounds = array<i64: 2, 2, 128>}, {transform_indices = @transform_1, window_bounds = array<i64: 2, 2, 128>}, {transform_indices = @transform_2, window_bounds = array<i64: 2, 8, 128>}]} {
    %c0 = arith.constant 0 : index
    %c0_0 = arith.constant 0 : index
    %c0_1 = arith.constant 0 : index
    %0 = vector.load %arg1[%c0, %c0_0, %c0_1] : memref<2x2x128xf32, #tpu.memory_space<vmem>>, vector<2x2x128xf32>
    %cst = arith.constant 5.000000e-01 : f32
    %1 = vector.broadcast %cst : f32 to vector<2x2x128xf32>
    %2 = arith.cmpf oge, %0, %1 : vector<2x2x128xf32>
    %3 = arith.extui %2 : vector<2x2x128xi1> to vector<2x2x128xi32>
    %4 = arith.sitofp %3 : vector<2x2x128xi32> to vector<2x2x128xf32>
    %c0_2 = arith.constant 0 : index
    %c0_3 = arith.constant 0 : index
    %c0_4 = arith.constant 0 : index
    %5 = vector.load %arg2[%c0_2, %c0_3, %c0_4] : memref<2x2x128xf32, #tpu.memory_space<vmem>>, vector<2x2x128xf32>
    %cst_5 = arith.constant 5.000000e-01 : f32
    %6 = vector.broadcast %cst_5 : f32 to vector<2x2x128xf32>
    %7 = arith.cmpf oge, %5, %6 : vector<2x2x128xf32>
    %8 = arith.extui %7 : vector<2x2x128xi1> to vector<2x2x128xi32>
    %9 = arith.sitofp %8 : vector<2x2x128xi32> to vector<2x2x128xf32>
    %10 = arith.mulf %4, %9 : vector<2x2x128xf32>
    %cst_6 = arith.constant dense<0.000000e+00> : vector<2x128xf32>
    %11 = vector.multi_reduction <add>, %10, %cst_6 [1] : vector<2x2x128xf32> to vector<2x128xf32>
    %cst_7 = arith.constant dense<0.000000e+00> : vector<2x128xf32>
    %12 = vector.multi_reduction <add>, %4, %cst_7 [1] : vector<2x2x128xf32> to vector<2x128xf32>
    %cst_8 = arith.constant dense<0.000000e+00> : vector<2x128xf32>
    %13 = vector.multi_reduction <add>, %9, %cst_8 [1] : vector<2x2x128xf32> to vector<2x128xf32>
    %14 = tpu.iota {dimensions = array<i32: 1>} : vector<2x8x128xi32>
    %c0_i32 = arith.constant 0 : i32
    %15 = vector.broadcast %c0_i32 : i32 to vector<2x8x128xi32>
    %16 = arith.cmpi eq, %14, %15 : vector<2x8x128xi32>
    %17 = vector.shape_cast %11 : vector<2x128xf32> to vector<2x1x128xf32>
    %c1_i32 = arith.constant 1 : i32
    %18 = vector.broadcast %c1_i32 : i32 to vector<2x8x128xi32>
    %19 = arith.cmpi eq, %14, %18 : vector<2x8x128xi32>
    %20 = vector.shape_cast %12 : vector<2x128xf32> to vector<2x1x128xf32>
    %c2_i32 = arith.constant 2 : i32
    %21 = vector.broadcast %c2_i32 : i32 to vector<2x8x128xi32>
    %22 = arith.cmpi eq, %14, %21 : vector<2x8x128xi32>
    %23 = vector.shape_cast %13 : vector<2x128xf32> to vector<2x1x128xf32>
    %cst_9 = arith.constant 0.000000e+00 : f32
    %24 = vector.shape_cast %23 : vector<2x1x128xf32> to vector<2x1x128xf32>
    %25 = vector.broadcast %24 : vector<2x1x128xf32> to vector<2x8x128xf32>
    %26 = vector.broadcast %cst_9 : f32 to vector<2x8x128xf32>
    %27 = arith.select %22, %25, %26 : vector<2x8x128xi1>, vector<2x8x128xf32>
    %28 = vector.shape_cast %20 : vector<2x1x128xf32> to vector<2x1x128xf32>
    %29 = vector.broadcast %28 : vector<2x1x128xf32> to vector<2x8x128xf32>
    %30 = arith.select %19, %29, %27 : vector<2x8x128xi1>, vector<2x8x128xf32>
    %31 = vector.shape_cast %17 : vector<2x1x128xf32> to vector<2x1x128xf32>
    %32 = vector.broadcast %31 : vector<2x1x128xf32> to vector<2x8x128xf32>
    %33 = arith.select %16, %32, %30 : vector<2x8x128xi1>, vector<2x8x128xf32>
    %c0_10 = arith.constant 0 : index
    %c0_11 = arith.constant 0 : index
    %c0_12 = arith.constant 0 : index
    %34 = vector.load %arg3[%c0_10, %c0_11, %c0_12] : memref<2x8x128xf32, #tpu.memory_space<vmem>>, vector<2x8x128xf32>
    tpu.vector_store %arg3[%c0_10, %c0_11, %c0_12], %33 {strides = array<i32>} : memref<2x8x128xf32, #tpu.memory_space<vmem>>, vector<2x8x128xf32>,
    return
  }
  func.func @transform_0(%arg0: i32) -> (i32, i32, i32) {
    %c0_i32 = arith.constant 0 : i32
    %c0_i32_0 = arith.constant 0 : i32
    %c0_i32_1 = arith.constant 0 : i32
    return %arg0, %c0_i32, %c0_i32_0 : i32, i32, i32
  }
  func.func @transform_1(%arg0: i32) -> (i32, i32, i32) {
    %c0_i32 = arith.constant 0 : i32
    %c0_i32_0 = arith.constant 0 : i32
    %c0_i32_1 = arith.constant 0 : i32
    return %arg0, %c0_i32, %c0_i32_0 : i32, i32, i32
  }
  func.func @transform_2(%arg0: i32) -> (i32, i32, i32) {
    %c0_i32 = arith.constant 0 : i32
    %c0_i32_0 = arith.constant 0 : i32
    %c0_i32_1 = arith.constant 0 : i32
    return %arg0, %c0_i32, %c0_i32_0 : i32, i32, i32
  }
}

</mosaic_0001>

<llo_original>
// kernel: tpu_custom_call.1
$region0: #{tpu_custom_call.1}
  #allocation0 [shape = 'u32[]', space=smem, size = 0x4, offset = 0x4, fixed_abs, tag = 'smem constant byte address 0x4 - core index']
  #allocation1 [shape = 'u32[72,128]{1,0:T(1,128)}', space=vmem, size = 0x9000, scoped, tag = 'internal scratch']
  %s0 = inlined_call_operand.hbm [shape: f32[2,2,128], index: 0, kind: input, shape index: {}]
  %s1 = inlined_call_operand.hbm [shape: f32[2,2,128], index: 1, kind: input, shape index: {}]
  %s2 = inlined_call_operand.hbm [shape: f32[2,8,128], index: 2, kind: output, shape index: {}]
  %s3 = sld [smem:[#allocation0]]
  $region26: #{tpu_custom_call.1} parent=0
    _
  %s5 = ssub.s32 1, %s3
  %s6 = scalar_select 0, %s5, %s3
  $region1: #{tpu_custom_call.1} parent=0
    #allocation2 [shape = 'u8[2048]{0}', space=vmem, size = 0x800, scoped, tag = 'input window, operand 0, single buffered']
    #allocation3 [shape = 's32[1]{0}', space=sflag, size = 0x4, scoped, tag = 'scoped memory for tpu_custom_call.1']
    #allocation4 [shape = 's32[1]{0}', space=sflag, size = 0x4, scoped, tag = 'scoped memory for tpu_custom_call.1']
    #allocation5 [shape = 'u8[2048]{0}', space=vmem, size = 0x800, scoped, tag = 'input window, operand 1, single buffered']
    #allocation6 [shape = 's32[1]{0}', space=sflag, size = 0x4, scoped, tag = 'scoped memory for tpu_custom_call.1']
    #allocation7 [shape = 'u8[8192]{0}', space=vmem, size = 0x2000, scoped, tag = 'output window, operand 0, single buffered']
    %7 = vsyncpa [#allocation3], 0
    %8 = vsyncpa [#allocation6], 0
    %9 = vsyncpa [#allocation4], 0
    // Predicated region
    $region2: #{tpu_custom_call.1} parent=1 // pred_check
      _
    $region3: #{tpu_custom_call.1} parent=1 // pred_check_branch
      %11 = sbr.rel (0) target = $region5
    $region4: #{tpu_custom_call.1} parent=1 // pred_region
      %13 = vsyncadd [#allocation3], 0
      %s14 = sshll.u32 %s0, 4
      %s15 = int_to_ptr.hbm [resolvable:$true] %s14
      %s16 = sshll.u32 [#allocation2], 4
      %s17 = int_to_ptr.vmem [resolvable:$true] %s16
      %22 = dma.hbm_to_vmem [thread:$0]  %s15, 64, %s17, [#allocation3], 32, 32, 2
    $region5: #{tpu_custom_call.1} parent=1 // pred_fallthru
      _
    // Predicated region
    $region6: #{tpu_custom_call.1} parent=1 // pred_check
      _
    $region7: #{tpu_custom_call.1} parent=1 // pred_check_branch
      %24 = sbr.rel (0) target = $region9
    $region8: #{tpu_custom_call.1} parent=1 // pred_region
      %26 = vsyncadd [#allocation6], 0
      %s27 = sshll.u32 %s1, 4
      %s28 = int_to_ptr.hbm [resolvable:$true] %s27
      %s29 = sshll.u32 [#allocation5], 4
      %s30 = int_to_ptr.vmem [resolvable:$true] %s29
      %35 = dma.hbm_to_vmem [thread:$0]  %s28, 64, %s30, [#allocation6], 32, 32, 2
    $region9: #{tpu_custom_call.1} parent=1 // pred_fallthru
      _
    // Predicated region
    $region10: #{tpu_custom_call.1} parent=1 // pred_check
      _
    $region11: #{tpu_custom_call.1} parent=1 // pred_check_branch
      %37 = sbr.rel (0) target = $region13
    $region12: #{tpu_custom_call.1} parent=1 // pred_region
      %39 = dma.done [#allocation3], 64
    $region13: #{tpu_custom_call.1} parent=1 // pred_fallthru
      _
    // Predicated region
    $region14: #{tpu_custom_call.1} parent=1 // pred_check
      _
    $region15: #{tpu_custom_call.1} parent=1 // pred_check_branch
      %41 = sbr.rel (0) target = $region17
    $region16: #{tpu_custom_call.1} parent=1 // pred_region
      %43 = dma.done [#allocation6], 64
    $region17: #{tpu_custom_call.1} parent=1 // pred_fallthru
      _
    %v44 = vld [vmem:[#allocation2] sm:$0x3]
    %v45 = vld [vmem:[#allocation2 + $0x2] sm:$0x3]
    %vm46 = vcmp.ge.f32.partialorder %v44, 0.5
    %vm47 = vcmp.ge.f32.partialorder %v45, 0.5
    %v48 = vsel %vm46, 1, 0
    %v49 = vsel %vm47, 1, 0
    %v50 = vcvt.s32.f32 %v48
    %v51 = vcvt.s32.f32 %v49
    %v52 = vld [vmem:[#allocation5] sm:$0x3]
    %v53 = vld [vmem:[#allocation5 + $0x2] sm:$0x3]
    %vm54 = vcmp.ge.f32.partialorder %v52, 0.5
    %vm55 = vcmp.ge.f32.partialorder %v53, 0.5
    %v56 = vsel %vm54, 1, 0
    %v57 = vsel %vm55, 1, 0
    %v58 = vcvt.s32.f32 %v56
    %v59 = vcvt.s32.f32 %v57
    %v60 = vmul.f32 %v50, %v58
    %v61 = vmul.f32 %v51, %v59
    %vm62 = vcmask 1041408
    %v63 = vsel %vm62, %v60, 0.0
    %v64 = vrot.slane %v63, 4
    %v65 = vadd.f32 %v63, %v64
    %v66 = vrot.slane %v65, 2
    %v67 = vadd.f32 %v65, %v66
    %v68 = vrot.slane %v67, 1
    %v69 = vadd.f32 %v67, %v68
    %v70 = vsel %vm62, %v61, 0.0
    %v71 = vrot.slane %v70, 4
    %v72 = vadd.f32 %v70, %v71
    %v73 = vrot.slane %v72, 2
    %v74 = vadd.f32 %v72, %v73
    %v75 = vrot.slane %v74, 1
    %v76 = vadd.f32 %v74, %v75
    %v77 = vsel %vm62, %v50, 0.0
    %v78 = vrot.slane %v77, 4
    %v79 = vadd.f32 %v77, %v78
    %v80 = vrot.slane %v79, 2
    %v81 = vadd.f32 %v79, %v80
    %v82 = vrot.slane %v81, 1
    %v83 = vadd.f32 %v81, %v82
    %v84 = vsel %vm62, %v51, 0.0
    %v85 = vrot.slane %v84, 4
    %v86 = vadd.f32 %v84, %v85
    %v87 = vrot.slane %v86, 2
    %v88 = vadd.f32 %v86, %v87
    %v89 = vrot.slane %v88, 1
    %v90 = vadd.f32 %v88, %v89
    %v91 = vsel %vm62, %v58, 0.0
    %v92 = vrot.slane %v91, 4
    %v93 = vadd.f32 %v91, %v92
    %v94 = vrot.slane %v93, 2
    %v95 = vadd.f32 %v93, %v94
    %v96 = vrot.slane %v95, 1
    %v97 = vadd.f32 %v95, %v96
    %v98 = vsel %vm62, %v59, 0.0
    %v99 = vrot.slane %v98, 4
    %v100 = vadd.f32 %v98, %v99
    %v101 = vrot.slane %v100, 2
    %v102 = vadd.f32 %v100, %v101
    %v103 = vrot.slane %v102, 1
    %v104 = vadd.f32 %v102, %v103
    %v105 = vlaneseq
    %v106 = vshrl.u32 %v105, 7
    %vm107 = vcmp.eq.s32.totalorder %v106, 0
    %vm108 = vcmp.eq.s32.totalorder %v106, 1
    %vm109 = vcmp.eq.s32.totalorder %v106, 2
    %v110 = vsel %vm109, %v97, 0.0
    %v111 = vsel %vm109, %v104, 0.0
    %v112 = vsel %vm108, %v83, %v110
    %v113 = vsel %vm108, %v90, %v111
    %v114 = vsel %vm107, %v69, %v112
    %v115 = vsel %vm107, %v76, %v113
    %116 = vst [vmem:[#allocation7] sm:$0xff] %v114
    %117 = vst [vmem:[#allocation7 + $0x8] sm:$0xff] %v115
    // Predicated region
    $region18: #{tpu_custom_call.1} parent=1 // pred_check
      _
    $region19: #{tpu_custom_call.1} parent=1 // pred_check_branch
      %119 = sbr.rel (0) target = $region21
    $region20: #{tpu_custom_call.1} parent=1 // pred_region
      %121 = vsyncadd [#allocation4], 0
      %s122 = sshll.u32 [#allocation7], 4
      %s123 = int_to_ptr.vmem [resolvable:$true] %s122
      %s124 = sshll.u32 %s2, 4
      %s125 = int_to_ptr.hbm [resolvable:$true] %s124
      %130 = dma.vmem_to_hbm [thread:$0]  %s123, 256, %s125, [#allocation4], 128, 128, 8
    $region21: #{tpu_custom_call.1} parent=1 // pred_fallthru
      _
    // Predicated region
    $region22: #{tpu_custom_call.1} parent=1 // pred_check
      _
    $region23: #{tpu_custom_call.1} parent=1 // pred_check_branch
      %132 = sbr.rel (0) target = $region25
    $region24: #{tpu_custom_call.1} parent=1 // pred_region
      %134 = dma.done [#allocation4], 256
    $region25: #{tpu_custom_call.1} parent=1 // pred_fallthru
      _
    %135 = vsyncpa [#allocation3], 1
    %136 = vsyncpa [#allocation6], 1
    %137 = vsyncpa [#allocation4], 1

</llo_original>
